<compile_context>
chip_gen: v7x
topology: tpu7x:2x2x1
jax: 0.10.0
libtpu: 0.0.40
codegen_flags: <defaults>
</compile_context>

<pallas_src>
import jax
import jax.numpy as jnp
from jax.experimental import pallas as pl
from jax.experimental.pallas import tpu as pltpu


def _make_mlp_kernel(num_layers):
    """Kernel body for one batch tile.

    refs layout: (x_ref, w0, b0, w1, b1, ..., w_{L-1}, b_{L-1}, out_ref)
    All weights are pre-packed so every layer is a single lane-dense matmul.
    """

    def kernel(*refs):
        x_ref = refs[0]
        o_ref = refs[-1]
        h = x_ref[...]                                           # (TB, E), stream dtype
        for li in range(num_layers):
            w = refs[1 + 2 * li][...]                            # packed weight (stream dtype)
            b = refs[2 + 2 * li][...]                            # (1, width), f32 (pre-cast)
            # Matmul in the streamed dtype (f32 or bf16); f32 accumulation on the MXU.
            h = jnp.dot(h.astype(w.dtype), w,
                        preferred_element_type=jnp.float32) + b
            if li < num_layers - 1:                              # ReLU on hidden layers only,
                h = jnp.maximum(h, 0.0)                          # bias-add/ReLU stay f32 (v5e-safe)
        o_ref[...] = h.astype(o_ref.dtype)                       # (TB, C)

    return kernel


def pack_params(params, *, stream_dtype=jnp.float32):
    """Pack per-class params into lane-fused matrices.  Call ONCE at load time.

    params: list of (W, b) with W: (C, d_in, d_out), b: (C, 1, d_out).
    Returns list of (Wp, bp):
      layer 0:  Wp (d_in, C*d_out)            (x is shared by all classes)
      layer l:  Wp (C*d_in, C*d_out)          block-diagonal
      bias:     bp (1, C*d_out)  float32
    The final layer (d_out=1) becomes a (C*d_last, C) block-column matrix, so
    the last matmul directly yields the (B, C) output.
    """
    packed = []
    for li, (W, b) in enumerate(params):
        C, d_in, d_out = W.shape
        if li == 0:
            Wp = jnp.transpose(W, (1, 0, 2)).reshape(d_in, C * d_out)
        else:
            # TODO(synk): block-diagonal packing is O(C^2*d_in*d_out); beyond
            # C*d of a few MXU tiles (~2048 lanes) switch hidden layers to a
            # class-batched dot_general / class grid axis instead of packing.
            eye = jnp.eye(C, dtype=W.dtype)
            # P[c*d_in + i, k*d_out + j] = W[c, i, j] * delta(c, k)
            Wp = jnp.einsum("cij,ck->cikj", W, eye).reshape(C * d_in, C * d_out)
        bp = b.reshape(1, C * d_out).astype(jnp.float32)         # pre-cast bias to f32
        packed.append((Wp.astype(stream_dtype), bp))
    return packed


def _round_up(x, m):
    return ((x + m - 1) // m) * m


def _choose_batch_tile(B, batch_tile):
    """Big tiles (amortize ~0.35 µs/step), multiple of 8, >=2 tiles when possible."""
    if B <= 16:
        return B                                # single full-batch block
    half = _round_up(pl.cdiv(B, 2), 8)          # keep >=2 tiles for v7x 2-TC sharding
    TB = min(batch_tile, half)
    return max(8, (TB // 8) * 8)


def br_classifier_forward(encodings, packed_params, *, batch_tile=4096,
                          out_dtype=jnp.float32):
    """encodings: (B, E); packed_params from pack_params(). Returns (B, C) in out_dtype."""
    B, E = encodings.shape
    num_layers = len(packed_params)
    C = packed_params[-1][0].shape[1]           # final packed layer: (C*d_last, C)

    TB = _choose_batch_tile(B, batch_tile)
    grid = (pl.cdiv(B, TB),)

    def _x_map(i):
        return (i, 0)

    def _const_map(i):
        return (0, 0)

    in_specs = [pl.BlockSpec((TB, E), _x_map)]
    flat_args = []
    for (Wp, bp) in packed_params:
        # Constant index_map -> fetched once, VMEM-resident across batch tiles.
        # Buffered(1) drops the useless second buffer (halves weight VMEM).
        in_specs.append(pl.BlockSpec(Wp.shape, _const_map,
                                     pipeline_mode=pl.Buffered(1)))
        in_specs.append(pl.BlockSpec(bp.shape, _const_map,
                                     pipeline_mode=pl.Buffered(1)))
        flat_args += [Wp, bp]

    out_shape = jax.ShapeDtypeStruct((B, C), out_dtype)
    out_spec = pl.BlockSpec((TB, C), _x_map)

    # Explicit VMEM budget: x (double-buffered) + resident weights (x1) +
    # inter-layer f32 temps + output (double-buffered), with 2x headroom.
    x_bytes = 2 * TB * E * encodings.dtype.itemsize
    w_bytes = sum(Wp.size * Wp.dtype.itemsize + bp.size * bp.dtype.itemsize
                  for Wp, bp in packed_params)
    wmax = max([E] + [Wp.shape[1] for Wp, _ in packed_params])
    h_bytes = 3 * TB * wmax * 4
    o_bytes = 2 * TB * C * jnp.dtype(out_dtype).itemsize
    est = x_bytes + w_bytes + h_bytes + o_bytes
    vmem_limit = int(min(64 << 20, max(32 << 20, 2 * est)))

    return pl.pallas_call(
        _make_mlp_kernel(num_layers),
        out_shape=out_shape,
        grid_spec=pltpu.PrefetchScalarGridSpec(
            num_scalar_prefetch=0,
            grid=grid,
            in_specs=in_specs,
            out_specs=out_spec,
        ),
        compiler_params=pltpu.CompilerParams(
            dimension_semantics=("parallel",),
            vmem_limit_bytes=vmem_limit),
    )(encodings, *flat_args)


def init_params(key, dims, num_class, encoding_size):
    """Deterministic per-class Linear params (PyTorch-style uniform init)."""
    layer_sizes = [encoding_size] + list(dims) + [1]
    params = []
    for li in range(len(layer_sizes) - 1):
        d_in, d_out = layer_sizes[li], layer_sizes[li + 1]
        key, kw, kb = jax.random.split(key, 3)
        bound = 1.0 / jnp.sqrt(jnp.float32(d_in))
        W = jax.random.uniform(kw, (num_class, d_in, d_out),
                               minval=-bound, maxval=bound, dtype=jnp.float32)
        b = jax.random.uniform(kb, (num_class, 1, d_out),
                               minval=-bound, maxval=bound, dtype=jnp.float32)
        params.append((W, b))
    return params


def reference_forward(encodings, params):
    """Pure-JAX reference mirroring the PyTorch forward."""
    C = params[0][0].shape[0]
    outs = []
    for c in range(C):
        h = encodings
        for li, (W, b) in enumerate(params):
            h = h @ W[c] + b[c]
            if li < len(params) - 1:
                h = jnp.maximum(h, 0.0)
        outs.append(h)                                          # (B, 1)
    stacked = jnp.stack(outs)[:, :, 0]                          # (C, B)
    return stacked.T                                            # (B, C)


if __name__ == "__main__":
    # Small, deterministic config.  batch=20 is NOT a multiple of the chosen
    # 16-row tile -> exercises the padded/masked tail tile and the 2-tile grid.
    batch = 20
    encoding_size = 32
    dims = [32, 16]
    num_class = 4

    key = jax.random.PRNGKey(0)
    key, k_x = jax.random.split(key)
    encodings = jax.random.normal(k_x, (batch, encoding_size), dtype=jnp.float32)
    params = init_params(key, dims, num_class, encoding_size)
    ref = reference_forward(encodings, params)

    # f32 path (packing done once, outside the forward call).
    packed_f32 = pack_params(params, stream_dtype=jnp.float32)
    out = br_classifier_forward(encodings, packed_f32)
    out = jax.block_until_ready(out)
    assert out.shape == (batch, num_class)
    assert out.dtype == jnp.float32
    assert jnp.allclose(out, ref, atol=1e-5, rtol=1e-5)

    # bf16-streamed path (v6e/v7x bandwidth optimization): bf16 x / weights,
    # f32 MXU accumulation + f32 bias/ReLU, f32 output.
    packed_bf16 = pack_params(params, stream_dtype=jnp.bfloat16)
    out_bf16 = br_classifier_forward(encodings.astype(jnp.bfloat16), packed_bf16)
    out_bf16 = jax.block_until_ready(out_bf16)
    assert out_bf16.shape == (batch, num_class)
    assert out_bf16.dtype == jnp.float32
    assert float(jnp.max(jnp.abs(out_bf16 - ref))) < 0.15

    print("KERNEL_OK")
</pallas_src>

<mosaic_0001>
module attributes {stable_mosaic.version = 11 : i64} {
  func.func @kernel(%arg0: i32, %arg1: memref<16x32xf32, #tpu.memory_space<vmem>>, %arg2: memref<32x128xf32, #tpu.memory_space<vmem>>, %arg3: memref<1x128xf32, #tpu.memory_space<vmem>>, %arg4: memref<128x64xf32, #tpu.memory_space<vmem>>, %arg5: memref<1x64xf32, #tpu.memory_space<vmem>>, %arg6: memref<64x4xf32, #tpu.memory_space<vmem>>, %arg7: memref<1x4xf32, #tpu.memory_space<vmem>>, %arg8: memref<16x4xf32, #tpu.memory_space<vmem>>) attributes {dimension_semantics = [#tpu.dimension_semantics<parallel>], iteration_bounds = array<i64: 2>, scalar_prefetch = 0 : i64, scratch_operands = 0 : i64, tpu.core_type = #tpu.core_type<tc>, window_params = [{transform_indices = @transform_0, window_bounds = array<i64: 16, 32>}, {pipeline_mode = #tpu.pipeline_mode<synchronous>, transform_indices = @transform_1, window_bounds = array<i64: 32, 128>}, {pipeline_mode = #tpu.pipeline_mode<synchronous>, transform_indices = @transform_2, window_bounds = array<i64: 1, 128>}, {pipeline_mode = #tpu.pipeline_mode<synchronous>, transform_indices = @transform_3, window_bounds = array<i64: 128, 64>}, {pipeline_mode = #tpu.pipeline_mode<synchronous>, transform_indices = @transform_4, window_bounds = array<i64: 1, 64>}, {pipeline_mode = #tpu.pipeline_mode<synchronous>, transform_indices = @transform_5, window_bounds = array<i64: 64, 4>}, {pipeline_mode = #tpu.pipeline_mode<synchronous>, transform_indices = @transform_6, window_bounds = array<i64: 1, 4>}, {transform_indices = @transform_7, window_bounds = array<i64: 16, 4>}]} {
    %c0 = arith.constant 0 : index
    %c0_0 = arith.constant 0 : index
    %0 = vector.load %arg1[%c0, %c0_0] : memref<16x32xf32, #tpu.memory_space<vmem>>, vector<16x32xf32>
    %c0_1 = arith.constant 0 : index
    %c0_2 = arith.constant 0 : index
    %1 = vector.load %arg2[%c0_1, %c0_2] : memref<32x128xf32, #tpu.memory_space<vmem>>, vector<32x128xf32>
    %c0_3 = arith.constant 0 : index
    %c0_4 = arith.constant 0 : index
    %2 = vector.load %arg3[%c0_3, %c0_4] : memref<1x128xf32, #tpu.memory_space<vmem>>, vector<1x128xf32>
    %cst = arith.constant dense<0.000000e+00> : vector<16x128xf32>
    %3 = tpu.matmul %0, %1, %cst {dimension_numbers = #tpu.dot_dimension_numbers<[1], [0], [0], [1], [0, 0, 1, 1], [], []>} : vector<16x32xf32>, vector<32x128xf32>, vector<16x128xf32> -> vector<16x128xf32>
    %4 = vector.broadcast %2 : vector<1x128xf32> to vector<16x128xf32>
    %5 = arith.addf %3, %4 : vector<16x128xf32>
    %cst_5 = arith.constant 0.000000e+00 : f32
    %6 = vector.broadcast %cst_5 : f32 to vector<16x128xf32>
    %7 = arith.maximumf %5, %6 : vector<16x128xf32>
    %c0_6 = arith.constant 0 : index
    %c0_7 = arith.constant 0 : index
    %8 = vector.load %arg4[%c0_6, %c0_7] : memref<128x64xf32, #tpu.memory_space<vmem>>, vector<128x64xf32>
    %c0_8 = arith.constant 0 : index
    %c0_9 = arith.constant 0 : index
    %9 = vector.load %arg5[%c0_8, %c0_9] : memref<1x64xf32, #tpu.memory_space<vmem>>, vector<1x64xf32>
    %cst_10 = arith.constant dense<0.000000e+00> : vector<16x64xf32>
    %10 = tpu.matmul %7, %8, %cst_10 {dimension_numbers = #tpu.dot_dimension_numbers<[1], [0], [0], [1], [0, 0, 1, 1], [], []>} : vector<16x128xf32>, vector<128x64xf32>, vector<16x64xf32> -> vector<16x64xf32>
    %11 = vector.broadcast %9 : vector<1x64xf32> to vector<16x64xf32>
    %12 = arith.addf %10, %11 : vector<16x64xf32>
    %cst_11 = arith.constant 0.000000e+00 : f32
    %13 = vector.broadcast %cst_11 : f32 to vector<16x64xf32>
    %14 = arith.maximumf %12, %13 : vector<16x64xf32>
    %c0_12 = arith.constant 0 : index
    %c0_13 = arith.constant 0 : index
    %15 = vector.load %arg6[%c0_12, %c0_13] : memref<64x4xf32, #tpu.memory_space<vmem>>, vector<64x4xf32>
    %c0_14 = arith.constant 0 : index
    %c0_15 = arith.constant 0 : index
    %16 = vector.load %arg7[%c0_14, %c0_15] : memref<1x4xf32, #tpu.memory_space<vmem>>, vector<1x4xf32>
    %cst_16 = arith.constant dense<0.000000e+00> : vector<16x4xf32>
    %17 = tpu.matmul %14, %15, %cst_16 {dimension_numbers = #tpu.dot_dimension_numbers<[1], [0], [0], [1], [0, 0, 1, 1], [], []>} : vector<16x64xf32>, vector<64x4xf32>, vector<16x4xf32> -> vector<16x4xf32>
    %18 = vector.broadcast %16 : vector<1x4xf32> to vector<16x4xf32>
    %19 = arith.addf %17, %18 : vector<16x4xf32>
    %c0_17 = arith.constant 0 : index
    %c0_18 = arith.constant 0 : index
    %20 = vector.load %arg8[%c0_17, %c0_18] : memref<16x4xf32, #tpu.memory_space<vmem>>, vector<16x4xf32>
    tpu.vector_store %arg8[%c0_17, %c0_18], %19 {strides = array<i32>} : memref<16x4xf32, #tpu.memory_space<vmem>>, vector<16x4xf32>,
    return
  }
  func.func @transform_0(%arg0: i32) -> (i32, i32) {
    %c0_i32 = arith.constant 0 : i32
    %c0_i32_0 = arith.constant 0 : i32
    return %arg0, %c0_i32 : i32, i32
  }
  func.func @transform_1(%arg0: i32) -> (i32, i32) {
    %c0_i32 = arith.constant 0 : i32
    %c0_i32_0 = arith.constant 0 : i32
    %c0_i32_1 = arith.constant 0 : i32
    return %c0_i32, %c0_i32_0 : i32, i32
  }
  func.func @transform_2(%arg0: i32) -> (i32, i32) {
    %c0_i32 = arith.constant 0 : i32
    %c0_i32_0 = arith.constant 0 : i32
    %c0_i32_1 = arith.constant 0 : i32
    return %c0_i32, %c0_i32_0 : i32, i32
  }
  func.func @transform_3(%arg0: i32) -> (i32, i32) {
    %c0_i32 = arith.constant 0 : i32
    %c0_i32_0 = arith.constant 0 : i32
    %c0_i32_1 = arith.constant 0 : i32
    return %c0_i32, %c0_i32_0 : i32, i32
  }
  func.func @transform_4(%arg0: i32) -> (i32, i32) {
    %c0_i32 = arith.constant 0 : i32
    %c0_i32_0 = arith.constant 0 : i32
    %c0_i32_1 = arith.constant 0 : i32
    return %c0_i32, %c0_i32_0 : i32, i32
  }
  func.func @transform_5(%arg0: i32) -> (i32, i32) {
    %c0_i32 = arith.constant 0 : i32
    %c0_i32_0 = arith.constant 0 : i32
    %c0_i32_1 = arith.constant 0 : i32
    return %c0_i32, %c0_i32_0 : i32, i32
  }
  func.func @transform_6(%arg0: i32) -> (i32, i32) {
    %c0_i32 = arith.constant 0 : i32
    %c0_i32_0 = arith.constant 0 : i32
    %c0_i32_1 = arith.constant 0 : i32
    return %c0_i32, %c0_i32_0 : i32, i32
  }
  func.func @transform_7(%arg0: i32) -> (i32, i32) {
    %c0_i32 = arith.constant 0 : i32
    %c0_i32_0 = arith.constant 0 : i32
    return %arg0, %c0_i32 : i32, i32
  }
}

</mosaic_0001>

<llo_original>
// kernel: tpu_custom_call.1
$region0: #{tpu_custom_call.1}
  #allocation0 [shape = 'u32[]', space=smem, size = 0x4, offset = 0x4, fixed_abs, tag = 'smem constant byte address 0x4 - core index']
  #allocation1 [shape = 'u32[144,128]{1,0:T(1,128)}', space=vmem, size = 0x12000, scoped, tag = 'internal scratch']
  %s0 = inlined_call_operand.vmem [shape: f32[20,32], index: 0, kind: input, shape index: {}]
  %s1 = inlined_call_operand.vmem [shape: f32[32,128], index: 1, kind: input, shape index: {}]
  %s2 = inlined_call_operand.vmem [shape: f32[1,128], index: 2, kind: input, shape index: {}]
  %s3 = inlined_call_operand.vmem [shape: f32[128,64], index: 3, kind: input, shape index: {}]
  %s4 = inlined_call_operand.vmem [shape: f32[1,64], index: 4, kind: input, shape index: {}]
  %s5 = inlined_call_operand.vmem [shape: f32[64,4], index: 5, kind: input, shape index: {}]
  %s6 = inlined_call_operand.vmem [shape: f32[1,4], index: 6, kind: input, shape index: {}]
  %s7 = inlined_call_operand.vmem [shape: f32[20,4], index: 7, kind: output, shape index: {}]
  %s8 = sld [smem:[#allocation0]]
  $region109: #{tpu_custom_call.1} parent=0
    _
  %s10 = ssub.s32 1, %s8
  %s11 = scalar_select 0, %s10, %s8
  $region1: #{tpu_custom_call.1} parent=0
    #allocation2 [shape = 'u8[16384]{0}', space=vmem, size = 0x4000, scoped, tag = 'output window, operand 0']
    loop: start=0, step=1, limit=4
    $region2: #{tpu_custom_call.1} parent=1 // loop_pre_header
      _
    $region3: #{tpu_custom_call.1} parent=1 // loop_header
      %s13 = sphi 0, %s17
      %p14 = scmp.ge.s32.totalorder %s13, 4
      %s23 = sphi 0, %s25
      %s26 = sphi 0, %s23
      %s27 = sphi 0, %s26
      %s43 = sphi 0, %s27
      %s47 = sphi 0, %s47
      %s49 = sphi 0, %s47
      %s50 = sphi 0, %s49
      %s64 = sphi 0, %s50
      %s68 = sphi 0, %s68
      %s70 = sphi 0, %s68
      %s71 = sphi 0, %s70
      %s85 = sphi 0, %s71
      %s89 = sphi 0, %s89
      %s91 = sphi 0, %s89
      %s92 = sphi 0, %s91
      %s106 = sphi 0, %s92
      %s110 = sphi 0, %s110
      %s112 = sphi 0, %s110
      %s113 = sphi 0, %s112
      %s127 = sphi 0, %s113
      %s131 = sphi 0, %s131
      %s133 = sphi 0, %s131
      %s134 = sphi 0, %s133
      %s148 = sphi 0, %s134
      %s152 = sphi 0, %s152
      %s154 = sphi 0, %s152
      %s155 = sphi 0, %s154
      %s169 = sphi 0, %s155
      %s175 = sphi 0, %s177
      %s178 = sphi 0, %s175
      %s179 = sphi 0, %s178
      %s195 = sphi 0, %s179
    $region4: #{tpu_custom_call.1} parent=1 // loop_header_branch
      %16 = sbr.rel (%p14) target = $region8
    $region5: #{tpu_custom_call.1} parent=1 // loop_body
      %s18 = ssub.s32 %s13, 1
      %s19 = ssub.s32 %s13, 2
      %s20 = sadd.s32 %s13, 1
      %s21 = ssub.s32 %s13, %s20
      %p22 = scmp.eq.s32.totalorder %s21, 0
      %s24 = sadd.s32 %s23, 1
      %s25 = scalar_select %p22, %s23, %s24
      %p28 = pneg %p22
      %p29 = scmp.eq.s32.totalorder %s13, 1
      %p30 = por %p28, %p29
      %p31 = scmp.ne.s32.totalorder %s23, %s26
      %p32 = scmp.eq.s32.totalorder %s13, 0
      %p33 = por %p31, %p32
      %p34 = scmp.ne.s32.totalorder %s23, %s26
      %p35 = scmp.eq.s32.totalorder %s18, 1
      %p36 = por %p34, %p35
      %p37 = scmp.ne.s32.totalorder %s26, %s27
      %p38 = scmp.eq.s32.totalorder %s18, 0
      %p39 = por %p37, %p38
      %p40 = scmp.ne.s32.totalorder %s26, %s27
      %p41 = scmp.eq.s32.totalorder %s19, 1
      %p42 = por %p40, %p41
      %p44 = scmp.ne.s32.totalorder %s27, %s43
      %p45 = scmp.eq.s32.totalorder %s19, 0
      %p46 = por %p44, %p45
      %s48 = sadd.s32 %s47, 1
      %p51 = scmp.eq.s32.totalorder %s13, 1
      %p52 = scmp.ne.s32.totalorder %s47, %s49
      %p53 = scmp.eq.s32.totalorder %s13, 0
      %p54 = por %p52, %p53
      %p55 = scmp.ne.s32.totalorder %s47, %s49
      %p56 = scmp.eq.s32.totalorder %s18, 1
      %p57 = por %p55, %p56
      %p58 = scmp.ne.s32.totalorder %s49, %s50
      %p59 = scmp.eq.s32.totalorder %s18, 0
      %p60 = por %p58, %p59
      %p61 = scmp.ne.s32.totalorder %s49, %s50
      %p62 = scmp.eq.s32.totalorder %s19, 1
      %p63 = por %p61, %p62
      %p65 = scmp.ne.s32.totalorder %s50, %s64
      %p66 = scmp.eq.s32.totalorder %s19, 0
      %p67 = por %p65, %p66
      %s69 = sadd.s32 %s68, 1
      %p72 = scmp.eq.s32.totalorder %s13, 1
      %p73 = scmp.ne.s32.totalorder %s68, %s70
      %p74 = scmp.eq.s32.totalorder %s13, 0
      %p75 = por %p73, %p74
      %p76 = scmp.ne.s32.totalorder %s68, %s70
      %p77 = scmp.eq.s32.totalorder %s18, 1
      %p78 = por %p76, %p77
      %p79 = scmp.ne.s32.totalorder %s70, %s71
      %p80 = scmp.eq.s32.totalorder %s18, 0
      %p81 = por %p79, %p80
      %p82 = scmp.ne.s32.totalorder %s70, %s71
      %p83 = scmp.eq.s32.totalorder %s19, 1
      %p84 = por %p82, %p83
      %p86 = scmp.ne.s32.totalorder %s71, %s85
      %p87 = scmp.eq.s32.totalorder %s19, 0
      %p88 = por %p86, %p87
      %s90 = sadd.s32 %s89, 1
      %p93 = scmp.eq.s32.totalorder %s13, 1
      %p94 = scmp.ne.s32.totalorder %s89, %s91
      %p95 = scmp.eq.s32.totalorder %s13, 0
      %p96 = por %p94, %p95
      %p97 = scmp.ne.s32.totalorder %s89, %s91
      %p98 = scmp.eq.s32.totalorder %s18, 1
      %p99 = por %p97, %p98
      %p100 = scmp.ne.s32.totalorder %s91, %s92
      %p101 = scmp.eq.s32.totalorder %s18, 0
      %p102 = por %p100, %p101
      %p103 = scmp.ne.s32.totalorder %s91, %s92
      %p104 = scmp.eq.s32.totalorder %s19, 1
      %p105 = por %p103, %p104
      %p107 = scmp.ne.s32.totalorder %s92, %s106
      %p108 = scmp.eq.s32.totalorder %s19, 0
      %p109 = por %p107, %p108
      %s111 = sadd.s32 %s110, 1
      %p114 = scmp.eq.s32.totalorder %s13, 1
      %p115 = scmp.ne.s32.totalorder %s110, %s112
      %p116 = scmp.eq.s32.totalorder %s13, 0
      %p117 = por %p115, %p116
      %p118 = scmp.ne.s32.totalorder %s110, %s112
      %p119 = scmp.eq.s32.totalorder %s18, 1
      %p120 = por %p118, %p119
      %p121 = scmp.ne.s32.totalorder %s112, %s113
      %p122 = scmp.eq.s32.totalorder %s18, 0
      %p123 = por %p121, %p122
      %p124 = scmp.ne.s32.totalorder %s112, %s113
      %p125 = scmp.eq.s32.totalorder %s19, 1
      %p126 = por %p124, %p125
      %p128 = scmp.ne.s32.totalorder %s113, %s127
      %p129 = scmp.eq.s32.totalorder %s19, 0
      %p130 = por %p128, %p129
      %s132 = sadd.s32 %s131, 1
      %p135 = scmp.eq.s32.totalorder %s13, 1
      %p136 = scmp.ne.s32.totalorder %s131, %s133
      %p137 = scmp.eq.s32.totalorder %s13, 0
      %p138 = por %p136, %p137
      %p139 = scmp.ne.s32.totalorder %s131, %s133
      %p140 = scmp.eq.s32.totalorder %s18, 1
      %p141 = por %p139, %p140
      %p142 = scmp.ne.s32.totalorder %s133, %s134
      %p143 = scmp.eq.s32.totalorder %s18, 0
      %p144 = por %p142, %p143
      %p145 = scmp.ne.s32.totalorder %s133, %s134
      %p146 = scmp.eq.s32.totalorder %s19, 1
      %p147 = por %p145, %p146
      %p149 = scmp.ne.s32.totalorder %s134, %s148
      %p150 = scmp.eq.s32.totalorder %s19, 0
      %p151 = por %p149, %p150
      %s153 = sadd.s32 %s152, 1
      %p156 = scmp.eq.s32.totalorder %s13, 1
      %p157 = scmp.ne.s32.totalorder %s152, %s154
      %p158 = scmp.eq.s32.totalorder %s13, 0
      %p159 = por %p157, %p158
      %p160 = scmp.ne.s32.totalorder %s152, %s154
      %p161 = scmp.eq.s32.totalorder %s18, 1
      %p162 = por %p160, %p161
      %p163 = scmp.ne.s32.totalorder %s154, %s155
      %p164 = scmp.eq.s32.totalorder %s18, 0
      %p165 = por %p163, %p164
      %p166 = scmp.ne.s32.totalorder %s154, %s155
      %p167 = scmp.eq.s32.totalorder %s19, 1
      %p168 = por %p166, %p167
      %p170 = scmp.ne.s32.totalorder %s155, %s169
      %p171 = scmp.eq.s32.totalorder %s19, 0
      %p172 = por %p170, %p171
      %s173 = ssub.s32 %s13, %s20
      %p174 = scmp.eq.s32.totalorder %s173, 0
      %s176 = sadd.s32 %s175, 1
      %s177 = scalar_select %p174, %s175, %s176
      %p180 = pneg %p174
      %p181 = scmp.eq.s32.totalorder %s13, 1
      %p182 = por %p180, %p181
      %p183 = scmp.ne.s32.totalorder %s175, %s178
      %p184 = scmp.eq.s32.totalorder %s13, 0
      %p185 = por %p183, %p184
      %p186 = scmp.ne.s32.totalorder %s175, %s178
      %p187 = scmp.eq.s32.totalorder %s18, 1
      %p188 = por %p186, %p187
      %p189 = scmp.ne.s32.totalorder %s178, %s179
      %p190 = scmp.eq.s32.totalorder %s18, 0
      %p191 = por %p189, %p190
      %p192 = scmp.ne.s32.totalorder %s178, %s179
      %p193 = scmp.eq.s32.totalorder %s19, 1
      %p194 = por %p192, %p193
      %p196 = scmp.ne.s32.totalorder %s179, %s195
      %p197 = scmp.eq.s32.totalorder %s19, 0
      %p198 = por %p196, %p197
      %p199 = scmp.le.s32.totalorder 1, %s13
      %p200 = scmp.lt.s32.totalorder %s13, 3
      %p201 = pnand %p199, %p200
      %p202 = pneg %p201
      // Predicated region
      $region9: #{tpu_custom_call.1} parent=5 // pred_check
        _
      $region10: #{tpu_custom_call.1} parent=5 // pred_check_branch
        %204 = sbr.rel (%p201) target = $region12
      $region11: #{tpu_custom_call.1} parent=5 // pred_region
        %s205 = ssub.s32 %s13, 1
        // Predicated region
        $region13: #{tpu_custom_call.1} parent=11 // pred_check
          %p206 = pneg %p60
        $region14: #{tpu_custom_call.1} parent=11 // pred_check_branch
          %208 = sbr.rel (%p206) target = $region16
        $region15: #{tpu_custom_call.1} parent=11 // pred_region
          _
        $region16: #{tpu_custom_call.1} parent=11 // pred_fallthru
          _
        // Predicated region
        $region17: #{tpu_custom_call.1} parent=11 // pred_check
          %p209 = pneg %p81
        $region18: #{tpu_custom_call.1} parent=11 // pred_check_branch
          %211 = sbr.rel (%p209) target = $region20
        $region19: #{tpu_custom_call.1} parent=11 // pred_region
          _
        $region20: #{tpu_custom_call.1} parent=11 // pred_fallthru
          _
        // Predicated region
        $region21: #{tpu_custom_call.1} parent=11 // pred_check
          %p212 = pneg %p102
        $region22: #{tpu_custom_call.1} parent=11 // pred_check_branch
          %214 = sbr.rel (%p212) target = $region24
        $region23: #{tpu_custom_call.1} parent=11 // pred_region
          _
        $region24: #{tpu_custom_call.1} parent=11 // pred_fallthru
          _
        // Predicated region
        $region25: #{tpu_custom_call.1} parent=11 // pred_check
          %p215 = pneg %p123
        $region26: #{tpu_custom_call.1} parent=11 // pred_check_branch
          %217 = sbr.rel (%p215) target = $region28
        $region27: #{tpu_custom_call.1} parent=11 // pred_region
          _
        $region28: #{tpu_custom_call.1} parent=11 // pred_fallthru
          _
        // Predicated region
        $region29: #{tpu_custom_call.1} parent=11 // pred_check
          %p218 = pneg %p144
        $region30: #{tpu_custom_call.1} parent=11 // pred_check_branch
          %220 = sbr.rel (%p218) target = $region32
        $region31: #{tpu_custom_call.1} parent=11 // pred_region
          _
        $region32: #{tpu_custom_call.1} parent=11 // pred_fallthru
          _
        // Predicated region
        $region33: #{tpu_custom_call.1} parent=11 // pred_check
          %p221 = pneg %p165
        $region34: #{tpu_custom_call.1} parent=11 // pred_check_branch
          %223 = sbr.rel (%p221) target = $region36
        $region35: #{tpu_custom_call.1} parent=11 // pred_region
          _
        $region36: #{tpu_custom_call.1} parent=11 // pred_fallthru
          _
      $region12: #{tpu_custom_call.1} parent=5 // pred_fallthru
        _
      %p224 = scmp.lt.s32.totalorder %s13, 2
      // Predicated region
      $region37: #{tpu_custom_call.1} parent=5 // pred_check
        %p225 = pneg %p224
      $region38: #{tpu_custom_call.1} parent=5 // pred_check_branch
        %227 = sbr.rel (%p225) target = $region40
      $region39: #{tpu_custom_call.1} parent=5 // pred_region
        // Predicated region
        $region41: #{tpu_custom_call.1} parent=39 // pred_check
          %p228 = pneg %p33
        $region42: #{tpu_custom_call.1} parent=39 // pred_check_branch
          %230 = sbr.rel (%p228) target = $region44
        $region43: #{tpu_custom_call.1} parent=39 // pred_region
          %s231 = smul.u32 2, %s13
          %s232 = ssub.s32 3, %s231
          %p233 = scmp.lt.s32.totalorder %s232, 2
          %s234 = scalar_select %p233, %s232, 2
          %s235 = smul.u32 128, %s234
          %p236 = scmp.lt.s32.totalorder %s231, 2
          %s237 = scalar_select %p236, %s231, 2
          %s238 = smul.addr %s237, 8
          %s239 = scalar_lea.vmem %s0, %s238
          %s240 = smul.u32 2, %s13
          %s241 = ssub.s32 3, %s240
          %p242 = scmp.lt.s32.totalorder %s241, 2
          %s243 = scalar_select %p242, %s241, 2
          %s244 = smul.u32 128, %s243
        $region44: #{tpu_custom_call.1} parent=39 // pred_fallthru
          _
      $region40: #{tpu_custom_call.1} parent=5 // pred_fallthru
        _
      %p245 = scmp.le.s32.totalorder 1, %s13
      %p246 = scmp.lt.s32.totalorder %s13, 3
      %p247 = pnand %p245, %p246
      %p248 = pneg %p247
      // Predicated region
      $region45: #{tpu_custom_call.1} parent=5 // pred_check
        _
      $region46: #{tpu_custom_call.1} parent=5 // pred_check_branch
        %250 = sbr.rel (%p247) target = $region48
      $region47: #{tpu_custom_call.1} parent=5 // pred_region
        %s251 = ssub.s32 %s13, 1
        %s252 = smul.u32 2, %s18
        %s253 = ssub.s32 3, %s252
        %p254 = scmp.lt.s32.totalorder %s253, 2
        %s255 = scalar_select %p254, %s253, 2
        %s256 = smul.u32 128, %s255
        %p257 = scmp.lt.s32.totalorder %s252, 2
        %s258 = scalar_select %p257, %s252, 2
        %s259 = smul.addr %s258, 8
        %s260 = scalar_lea.vmem %s0, %s259
        %p261 = pneg %p39
        %p262 = pneg %p36
        %p263 = pneg %p60
        %p264 = pneg %p57
        %p265 = pneg %p81
        %p266 = pneg %p78
        %p267 = pneg %p102
        %p268 = pneg %p99
        %p269 = pneg %p123
        %p270 = pneg %p120
        %p271 = pneg %p144
        %p272 = pneg %p141
        %p273 = pneg %p165
        %p274 = pneg %p162
        %p275 = pneg %p191
        %p276 = pneg %p188
        %s277 = sand.u32 %s178, 1
        %s278 = sand.u32 %s178, 1
        %s279 = smul.addr %s278, 16
        %s280 = scalar_lea.vmem [#allocation2], %s279
        %s281 = smul.u32 2, %s18
        %s282 = ssub.s32 3, %s281
        %p283 = scmp.lt.s32.totalorder %s282, 2
        %s284 = scalar_select %p283, %s282, 2
        %s285 = smul.u32 128, %s284
        %p286 = scmp.lt.s32.totalorder %s281, 2
        %s287 = scalar_select %p286, %s281, 2
        %s288 = smul.addr %s287, 8
        %s289 = scalar_lea.vmem %s0, %s288
        %s290 = smul.u32 2, %s18
        %s291 = ssub.s32 3, %s290
        %p292 = scmp.lt.s32.totalorder %s291, 2
        %s293 = scalar_select %p292, %s291, 2
        %s294 = smul.u32 128, %s293
        %s295 = smul.u32 2, %s18
        %s296 = ssub.s32 3, %s295
        %p297 = scmp.lt.s32.totalorder %s296, 2
        %s298 = scalar_select %p297, %s296, 2
        %s299 = smul.u32 128, %s298
        %v300 = vld [vmem:[%s289] sm:$0xff]
        %v301 = vld [vmem:[%s289 + $0x8] sm:$0xff]
        %v302 = vld [vmem:[%s1] sm:$0xff]
        %v303 = vld [vmem:[%s1 + $0x8] sm:$0xff]
        %v304 = vld [vmem:[%s1 + $0x10] sm:$0xff]
        %v305 = vld [vmem:[%s1 + $0x18] sm:$0xff]
        %v306 = vld [vmem:[%s2] sm:$0x1]
        %v308 = vlaneseq
        %v309 = vshrl.u32 %v308, 7
        %v310 = vsub.s32 0, %v309
        %v311 = vrot.slane %v306, %v310
        %vm313 = vcmask 261120
        %v315 = vsel %vm313, %v300, 0
        %v318 = vsel %vm313, %v301, 0
        %320 = vmatprep.subr.mxu0 0.0
        %321 = vmatpush1.msra.mxu0 %v302
        %322 = vmatprep.subr.mxu0 0.0
        %323 = vmatpush1.msra.mxu0 %v303
        %324 = vmatprep.subr.mxu0 0.0
        %325 = vmatpush1.msra.mxu0 %v304
        %326 = vmatprep.subr.mxu0 0.0
        %327 = vmatpush1.msra.mxu0 %v305
        %328 = vmatprep.subr.mxu0 0.0
        %329 = vmatpush1.msra.mxu0 0.0
        %330 = vmatprep.subr.mxu0 0.0
        %331 = vmatpush1.msra.mxu0 0.0
        %332 = vmatprep.subr.mxu0 0.0
        %333 = vmatpush1.msra.mxu0 0.0
        %334 = vmatprep.subr.mxu0 0.0
        %335 = vmatpush1.msra.mxu0 0.0
        %336 = vmatprep.subr.mxu0 0.0
        %337 = vmatpush1.msra.mxu0 0.0
        %338 = vmatprep.subr.mxu0 0.0
        %339 = vmatpush1.msra.mxu0 0.0
        %340 = vmatprep.subr.mxu0 0.0
        %341 = vmatpush1.msra.mxu0 0.0
        %342 = vmatprep.subr.mxu0 0.0
        %343 = vmatpush1.msra.mxu0 0.0
        %344 = vmatprep.subr.mxu0 0.0
        %345 = vmatpush1.msra.mxu0 0.0
        %346 = vmatprep.subr.mxu0 0.0
        %347 = vmatpush1.msra.mxu0 0.0
        %348 = vmatprep.subr.mxu0 0.0
        %349 = vmatpush1.msra.mxu0 0.0
        %350 = vmatprep.subr.mxu0 0.0
        %351 = vmatpush1.msra.mxu0 0.0
        %352 = vmatprep.subr.mxu0 0.0
        %353 = vmatpush1.msra.mxu0 0.0
        %354 = vmatprep.subr.mxu0 0.0
        %355 = vmatpush1.msra.mxu0 0.0
        %356 = vmatprep.subr.mxu0 0.0
        %357 = vmatpush1.msra.mxu0 0.0
        %358 = vmatprep.subr.mxu0 0.0
        %359 = vmatpush1.msra.mxu0 0.0
        %360 = vmatprep.subr.mxu0 0.0
        %361 = vmatpush1.msra.mxu0 0.0
        %362 = vmatprep.subr.mxu0 0.0
        %363 = vmatpush1.msra.mxu0 0.0
        %364 = vmatprep.subr.mxu0 0.0
        %365 = vmatpush1.msra.mxu0 0.0
        %366 = vmatprep.subr.mxu0 0.0
        %367 = vmatpush1.msra.mxu0 0.0
        %368 = vmatprep.subr.mxu0 0.0
        %369 = vmatpush1.msra.mxu0 0.0
        %370 = vmatprep.subr.mxu0 0.0
        %371 = vmatpush1.msra.mxu0 0.0
        %372 = vmatprep.subr.mxu0 0.0
        %373 = vmatpush1.msra.mxu0 0.0
        %374 = vmatprep.subr.mxu0 0.0
        %375 = vmatpush1.msra.mxu0 0.0
        %376 = vmatprep.subr.mxu0 0.0
        %377 = vmatpush1.msra.mxu0 0.0
        %378 = vmatprep.subr.mxu0 0.0
        %379 = vmatpush1.msra.mxu0 0.0
        %380 = vmatprep.subr.mxu0 0.0
        %381 = vmatpush1.msra.mxu0 0.0
        %382 = vmatprep.subr.mxu0 0.0
        %383 = vmatpush1.msra.mxu0 0.0
        %384 = vmatprep.mubr.f32.mxu0 0.0
        %385 = vmatmul.mubr.f32.gmra.mrb[0].mxu0 %v315
        %v386 = vpop.f32.mrb[0].mxu0
        %v387 = vadd.f32 %v311, %v386
        %v388 = vpop.f32.mrb[0].mxu0
        %389 = vmatprep.mubr.f32.mxu0 0.0
        %390 = vmatmul.mubr.f32.gmra.mrb[0].mxu0 %v318
        %v391 = vpop.f32.mrb[0].mxu0
        %v392 = vadd.f32 %v311, %v391
        %v393 = vpop.f32.mrb[0].mxu0
        %394 = vdwg.mxu0
        %v395 = vmax.f32 %v387, 0.0
        %v396 = vmax.f32 %v392, 0.0
        %v397 = vld [vmem:[%s3] sm:$0xff]
        %v398 = vld [vmem:[%s3 + $0x8] sm:$0xff]
        %v399 = vld [vmem:[%s3 + $0x10] sm:$0xff]
        %v400 = vld [vmem:[%s3 + $0x18] sm:$0xff]
        %v401 = vld [vmem:[%s3 + $0x20] sm:$0xff]
        %v402 = vld [vmem:[%s3 + $0x28] sm:$0xff]
        %v403 = vld [vmem:[%s3 + $0x30] sm:$0xff]
        %v404 = vld [vmem:[%s3 + $0x38] sm:$0xff]
        %v405 = vld [vmem:[%s3 + $0x40] sm:$0xff]
        %v406 = vld [vmem:[%s3 + $0x48] sm:$0xff]
        %v407 = vld [vmem:[%s3 + $0x50] sm:$0xff]
        %v408 = vld [vmem:[%s3 + $0x58] sm:$0xff]
        %v409 = vld [vmem:[%s3 + $0x60] sm:$0xff]
        %v410 = vld [vmem:[%s3 + $0x68] sm:$0xff]
        %v411 = vld [vmem:[%s3 + $0x70] sm:$0xff]
        %v412 = vld [vmem:[%s3 + $0x78] sm:$0xff]
        %v413 = vld [vmem:[%s4] sm:$0x1]
        %v415 = vlaneseq
        %v416 = vshrl.u32 %v415, 7
        %v417 = vsub.s32 0, %v416
        %v418 = vrot.slane %v413, %v417
        %420 = vmatprep.subr.mxu0 0.0
        %421 = vmatpush1.msra.mxu0 %v397
        %422 = vmatprep.subr.mxu0 0.0
        %423 = vmatpush1.msra.mxu0 %v398
        %424 = vmatprep.subr.mxu0 0.0
        %425 = vmatpush1.msra.mxu0 %v399
        %426 = vmatprep.subr.mxu0 0.0
        %427 = vmatpush1.msra.mxu0 %v400
        %428 = vmatprep.subr.mxu0 0.0
        %429 = vmatpush1.msra.mxu0 %v401
        %430 = vmatprep.subr.mxu0 0.0
        %431 = vmatpush1.msra.mxu0 %v402
        %432 = vmatprep.subr.mxu0 0.0
        %433 = vmatpush1.msra.mxu0 %v403
        %434 = vmatprep.subr.mxu0 0.0
        %435 = vmatpush1.msra.mxu0 %v404
        %436 = vmatprep.subr.mxu0 0.0
        %437 = vmatpush1.msra.mxu0 %v405
        %438 = vmatprep.subr.mxu0 0.0
        %439 = vmatpush1.msra.mxu0 %v406
        %440 = vmatprep.subr.mxu0 0.0
        %441 = vmatpush1.msra.mxu0 %v407
        %442 = vmatprep.subr.mxu0 0.0
        %443 = vmatpush1.msra.mxu0 %v408
        %444 = vmatprep.subr.mxu0 0.0
        %445 = vmatpush1.msra.mxu0 %v409
        %446 = vmatprep.subr.mxu0 0.0
        %447 = vmatpush1.msra.mxu0 %v410
        %448 = vmatprep.subr.mxu0 0.0
        %449 = vmatpush1.msra.mxu0 %v411
        %450 = vmatprep.subr.mxu0 0.0
        %451 = vmatpush1.msra.mxu0 %v412
        %452 = vmatprep.subr.mxu0 0.0
        %453 = vmatpush1.msra.mxu0 0.0
        %454 = vmatprep.subr.mxu0 0.0
        %455 = vmatpush1.msra.mxu0 0.0
        %456 = vmatprep.subr.mxu0 0.0
        %457 = vmatpush1.msra.mxu0 0.0
        %458 = vmatprep.subr.mxu0 0.0
        %459 = vmatpush1.msra.mxu0 0.0
        %460 = vmatprep.subr.mxu0 0.0
        %461 = vmatpush1.msra.mxu0 0.0
        %462 = vmatprep.subr.mxu0 0.0
        %463 = vmatpush1.msra.mxu0 0.0
        %464 = vmatprep.subr.mxu0 0.0
        %465 = vmatpush1.msra.mxu0 0.0
        %466 = vmatprep.subr.mxu0 0.0
        %467 = vmatpush1.msra.mxu0 0.0
        %468 = vmatprep.subr.mxu0 0.0
        %469 = vmatpush1.msra.mxu0 0.0
        %470 = vmatprep.subr.mxu0 0.0
        %471 = vmatpush1.msra.mxu0 0.0
        %472 = vmatprep.subr.mxu0 0.0
        %473 = vmatpush1.msra.mxu0 0.0
        %474 = vmatprep.subr.mxu0 0.0
        %475 = vmatpush1.msra.mxu0 0.0
        %476 = vmatprep.subr.mxu0 0.0
        %477 = vmatpush1.msra.mxu0 0.0
        %478 = vmatprep.subr.mxu0 0.0
        %479 = vmatpush1.msra.mxu0 0.0
        %480 = vmatprep.subr.mxu0 0.0
        %481 = vmatpush1.msra.mxu0 0.0
        %482 = vmatprep.subr.mxu0 0.0
        %483 = vmatpush1.msra.mxu0 0.0
        %484 = vmatprep.mubr.f32.mxu0 0.0
        %485 = vmatmul.mubr.f32.gmra.mrb[0].mxu0 %v395
        %v486 = vpop.f32.mrb[0].mxu0
        %v487 = vadd.f32 %v418, %v486
        %v488 = vpop.f32.mrb[0].mxu0
        %489 = vmatprep.mubr.f32.mxu0 0.0
        %490 = vmatmul.mubr.f32.gmra.mrb[0].mxu0 %v396
        %v491 = vpop.f32.mrb[0].mxu0
        %v492 = vadd.f32 %v418, %v491
        %v493 = vpop.f32.mrb[0].mxu0
        %494 = vdwg.mxu0
        %v495 = vmax.f32 %v487, 0.0
        %v496 = vmax.f32 %v492, 0.0
        %v497 = vld [vmem:[%s5] sm:$0xff]
        %v498 = vld [vmem:[%s5 + $0x8] sm:$0xff]
        %v499 = vld [vmem:[%s5 + $0x10] sm:$0xff]
        %v500 = vld [vmem:[%s5 + $0x18] sm:$0xff]
        %v501 = vld [vmem:[%s5 + $0x20] sm:$0xff]
        %v502 = vld [vmem:[%s5 + $0x28] sm:$0xff]
        %v503 = vld [vmem:[%s5 + $0x30] sm:$0xff]
        %v504 = vld [vmem:[%s5 + $0x38] sm:$0xff]
        %v505 = vld [vmem:[%s6] sm:$0x1]
        %v507 = vlaneseq
        %v508 = vshrl.u32 %v507, 7
        %v509 = vsub.s32 0, %v508
        %v510 = vrot.slane %v505, %v509
        %vm512 = vcmask 523264
        %v514 = vsel %vm512, %v495, 0
        %v517 = vsel %vm512, %v496, 0
        %519 = vmatprep.subr.mxu0 0.0
        %520 = vmatpush1.msra.mxu0 %v497
        %521 = vmatprep.subr.mxu0 0.0
        %522 = vmatpush1.msra.mxu0 %v498
        %523 = vmatprep.subr.mxu0 0.0
        %524 = vmatpush1.msra.mxu0 %v499
        %525 = vmatprep.subr.mxu0 0.0
        %526 = vmatpush1.msra.mxu0 %v500
        %527 = vmatprep.subr.mxu0 0.0
        %528 = vmatpush1.msra.mxu0 %v501
        %529 = vmatprep.subr.mxu0 0.0
        %530 = vmatpush1.msra.mxu0 %v502
        %531 = vmatprep.subr.mxu0 0.0
        %532 = vmatpush1.msra.mxu0 %v503
        %533 = vmatprep.subr.mxu0 0.0
        %534 = vmatpush1.msra.mxu0 %v504
        %535 = vmatprep.subr.mxu0 0.0
        %536 = vmatpush1.msra.mxu0 0.0
        %537 = vmatprep.subr.mxu0 0.0
        %538 = vmatpush1.msra.mxu0 0.0
        %539 = vmatprep.subr.mxu0 0.0
        %540 = vmatpush1.msra.mxu0 0.0
        %541 = vmatprep.subr.mxu0 0.0
        %542 = vmatpush1.msra.mxu0 0.0
        %543 = vmatprep.subr.mxu0 0.0
        %544 = vmatpush1.msra.mxu0 0.0
        %545 = vmatprep.subr.mxu0 0.0
        %546 = vmatpush1.msra.mxu0 0.0
        %547 = vmatprep.subr.mxu0 0.0
        %548 = vmatpush1.msra.mxu0 0.0
        %549 = vmatprep.subr.mxu0 0.0
        %550 = vmatpush1.msra.mxu0 0.0
        %551 = vmatprep.subr.mxu0 0.0
        %552 = vmatpush1.msra.mxu0 0.0
        %553 = vmatprep.subr.mxu0 0.0
        %554 = vmatpush1.msra.mxu0 0.0
        %555 = vmatprep.subr.mxu0 0.0
        %556 = vmatpush1.msra.mxu0 0.0
        %557 = vmatprep.subr.mxu0 0.0
        %558 = vmatpush1.msra.mxu0 0.0
        %559 = vmatprep.subr.mxu0 0.0
        %560 = vmatpush1.msra.mxu0 0.0
        %561 = vmatprep.subr.mxu0 0.0
        %562 = vmatpush1.msra.mxu0 0.0
        %563 = vmatprep.subr.mxu0 0.0
        %564 = vmatpush1.msra.mxu0 0.0
        %565 = vmatprep.subr.mxu0 0.0
        %566 = vmatpush1.msra.mxu0 0.0
        %567 = vmatprep.subr.mxu0 0.0
        %568 = vmatpush1.msra.mxu0 0.0
        %569 = vmatprep.subr.mxu0 0.0
        %570 = vmatpush1.msra.mxu0 0.0
        %571 = vmatprep.subr.mxu0 0.0
        %572 = vmatpush1.msra.mxu0 0.0
        %573 = vmatprep.subr.mxu0 0.0
        %574 = vmatpush1.msra.mxu0 0.0
        %575 = vmatprep.subr.mxu0 0.0
        %576 = vmatpush1.msra.mxu0 0.0
        %577 = vmatprep.subr.mxu0 0.0
        %578 = vmatpush1.msra.mxu0 0.0
        %579 = vmatprep.subr.mxu0 0.0
        %580 = vmatpush1.msra.mxu0 0.0
        %581 = vmatprep.subr.mxu0 0.0
        %582 = vmatpush1.msra.mxu0 0.0
        %583 = vmatprep.mubr.f32.mxu0 0.0
        %584 = vmatmul.mubr.f32.gmra.mrb[0].mxu0 %v514
        %v585 = vpop.f32.mrb[0].mxu0
        %v586 = vadd.f32 %v510, %v585
        %v587 = vpop.f32.mrb[0].mxu0
        %588 = vmatprep.mubr.f32.mxu0 0.0
        %589 = vmatmul.mubr.f32.gmra.mrb[0].mxu0 %v517
        %v590 = vpop.f32.mrb[0].mxu0
        %v591 = vadd.f32 %v510, %v590
        %v592 = vpop.f32.mrb[0].mxu0
        %593 = vdwg.mxu0
        %vm594 = vcmask 31744
        %595 = vst.msk [vmem:[%s280] sm:$0xff] %vm594, %v586
        %596 = vst.msk [vmem:[%s280 + $0x8] sm:$0xff] %vm594, %v591
        %s597 = sand.u32 %s178, 1
        %s598 = sand.u32 %s178, 1
        %s599 = smul.addr %s598, 16
        %s600 = scalar_lea.vmem [#allocation2], %s599
        // Predicated region
        $region49: #{tpu_custom_call.1} parent=47 // pred_check
          %p601 = pneg %p188
        $region50: #{tpu_custom_call.1} parent=47 // pred_check_branch
          %603 = sbr.rel (%p601) target = $region52
        $region51: #{tpu_custom_call.1} parent=47 // pred_region
          %s604 = smul.u32 2, %s18
          %s605 = ssub.s32 3, %s604
          %p606 = scmp.lt.s32.totalorder %s605, 2
          %s607 = scalar_select %p606, %s605, 2
          %s608 = smul.u32 128, %s607
          %p609 = scmp.ne.s32.totalorder 0, %s608
          %s610 = smul.addr %s604, 8
          %s611 = scalar_lea.vmem %s7, %s610
          // Predicated region
          $region53: #{tpu_custom_call.1} parent=51 // pred_check
            %p612 = pneg %p609
          $region54: #{tpu_custom_call.1} parent=51 // pred_check_branch
            %614 = sbr.rel (%p612) target = $region56
          $region55: #{tpu_custom_call.1} parent=51 // pred_region
            // Predicated region
            $region57: #{tpu_custom_call.1} parent=55 // pred_check
              _
            $region58: #{tpu_custom_call.1} parent=55 // pred_check_branch
              %616 = sbr.rel (0) target = $region60
            $region59: #{tpu_custom_call.1} parent=55 // pred_region
              // Predicated region
              $region79: #{tpu_custom_call.1} parent=59 // pred_check
                _
              $region80: #{tpu_custom_call.1} parent=59 // pred_check_branch
                %667 = sbr.rel (0) target = $region82
              $region81: #{tpu_custom_call.1} parent=59 // pred_region
                %s668 = sshrl.u32 %s607, 1
                // While loop
                $region83: #{tpu_custom_call.1} parent=81 // loop_pre_header
                  _
                $region84: #{tpu_custom_call.1} parent=81 // loop_header
                  %s670 = sphi 0, %s672
                  %p671 = scmp.ge.s32.totalorder %s670, %s668
                  %s675 = sphi 0, %s684
                  %s676 = sphi %s600, %s687
                  %s677 = sphi %s611, %s688
                $region85: #{tpu_custom_call.1} parent=81 // loop_header_branch
                  %674 = sbr.rel (%p671) target = $region89
                $region86: #{tpu_custom_call.1} parent=81 // loop_body
                  %v678 = vld [vmem:[%s676] sm:$0xff]
                  %679 = vst [vmem:[%s677] sm:$0xff] %v678
                  %v680 = vld [vmem:[%s676 + $0x8] sm:$0xff]
                  %681 = vst [vmem:[%s677 + $0x8] sm:$0xff] %v680
                  %s682 = sadd.s32 1, %s675
                  %p683 = scmp.ge.s32.totalorder %s682, %s668
                  %s684 = scalar_select %p683, 0, %s682
                  %s685 = smul.u32 %s684, 16
                  %s686 = smul.u32 %s684, 16
                  %s687 = scalar_lea.vmem %s600, %s685 [#allocation2]
                  %s688 = scalar_lea.vmem %s611, %s686
                $region87: #{tpu_custom_call.1} parent=81 // loop_footer
                  %s672 = sadd.s32 %s670, 1
                $region88: #{tpu_custom_call.1} parent=81 // loop_footer_branch
                  %669 = sbr.rel target = $region84
                $region89: #{tpu_custom_call.1} parent=81 // loop_exit
                  _
                %s689 = sshrl.u32 %s607, 1
                %s690 = sand.u32 %s607, 1
                %s691 = smul.u32 %s689, 2
                %s692 = smul.u32 8, %s691
                %s693 = scalar_lea.vmem %s600, %s692 [#allocation2]
                %s694 = smul.u32 8, %s691
                %s695 = scalar_lea.vmem %s611, %s694
                // While loop
                $region90: #{tpu_custom_call.1} parent=81 // loop_pre_header
                  _
                $region91: #{tpu_custom_call.1} parent=81 // loop_header
                  %s697 = sphi 0, %s699
                  %p698 = scmp.ge.s32.totalorder %s697, %s690
                  %s702 = sphi 0, %s709
                  %s703 = sphi %s693, %s712
                  %s704 = sphi %s695, %s713
                $region92: #{tpu_custom_call.1} parent=81 // loop_header_branch
                  %701 = sbr.rel (%p698) target = $region96
                $region93: #{tpu_custom_call.1} parent=81 // loop_body
                  %v705 = vld [vmem:[%s703] sm:$0xff]
                  %706 = vst [vmem:[%s704] sm:$0xff] %v705
                  %s707 = sadd.s32 1, %s702
                  %p708 = scmp.ge.s32.totalorder %s707, %s690
                  %s709 = scalar_select %p708, 0, %s707
                  %s710 = smul.u32 %s709, 8
                  %s711 = smul.u32 %s709, 8
                  %s712 = scalar_lea.vmem %s693, %s710 [#allocation2]
                  %s713 = scalar_lea.vmem %s695, %s711
                $region94: #{tpu_custom_call.1} parent=81 // loop_footer
                  %s699 = sadd.s32 %s697, 1
                $region95: #{tpu_custom_call.1} parent=81 // loop_footer_branch
                  %696 = sbr.rel target = $region91
                $region96: #{tpu_custom_call.1} parent=81 // loop_exit
                  _
              $region82: #{tpu_custom_call.1} parent=59 // pred_fallthru
                _
              // Predicated region
              $region97: #{tpu_custom_call.1} parent=59 // pred_check
                _
              $region98: #{tpu_custom_call.1} parent=59 // pred_check_branch
                %715 = sbr.rel target = $region100
              $region99: #{tpu_custom_call.1} parent=59 // pred_region
                _
              $region100: #{tpu_custom_call.1} parent=59 // pred_fallthru
                _
            $region60: #{tpu_custom_call.1} parent=55 // pred_fallthru
              _
            // Predicated region
            $region61: #{tpu_custom_call.1} parent=55 // pred_check
              _
            $region62: #{tpu_custom_call.1} parent=55 // pred_check_branch
              %618 = sbr.rel target = $region64
            $region63: #{tpu_custom_call.1} parent=55 // pred_region
              %s620 = sshrl.u32 %s607, 1
              // While loop
              $region65: #{tpu_custom_call.1} parent=63 // loop_pre_header
                _
              $region66: #{tpu_custom_call.1} parent=63 // loop_header
                %s622 = sphi 0, %s624
                %p623 = scmp.ge.s32.totalorder %s622, %s620
                %s627 = sphi 0, %s636
                %s628 = sphi %s600, %s639
                %s629 = sphi %s611, %s640
              $region67: #{tpu_custom_call.1} parent=63 // loop_header_branch
                %626 = sbr.rel (%p623) target = $region71
              $region68: #{tpu_custom_call.1} parent=63 // loop_body
                %v630 = vld [vmem:[%s628] sm:$0xff]
                %631 = vst [vmem:[%s629] sm:$0xff] %v630
                %v632 = vld [vmem:[%s628 + $0x8] sm:$0xff]
                %633 = vst [vmem:[%s629 + $0x8] sm:$0xff] %v632
                %s634 = sadd.s32 1, %s627
                %p635 = scmp.ge.s32.totalorder %s634, %s620
                %s636 = scalar_select %p635, 0, %s634
                %s637 = smul.u32 %s636, 16
                %s638 = smul.u32 %s636, 16
                %s639 = scalar_lea.vmem %s600, %s637 [#allocation2]
                %s640 = scalar_lea.vmem %s611, %s638
              $region69: #{tpu_custom_call.1} parent=63 // loop_footer
                %s624 = sadd.s32 %s622, 1
              $region70: #{tpu_custom_call.1} parent=63 // loop_footer_branch
                %621 = sbr.rel target = $region66
              $region71: #{tpu_custom_call.1} parent=63 // loop_exit
                _
              %s641 = sshrl.u32 %s607, 1
              %s642 = sand.u32 %s607, 1
              %s643 = smul.u32 %s641, 2
              %s644 = smul.u32 8, %s643
              %s645 = scalar_lea.vmem %s600, %s644 [#allocation2]
              %s646 = smul.u32 8, %s643
              %s647 = scalar_lea.vmem %s611, %s646
              // While loop
              $region72: #{tpu_custom_call.1} parent=63 // loop_pre_header
                _
              $region73: #{tpu_custom_call.1} parent=63 // loop_header
                %s649 = sphi 0, %s651
                %p650 = scmp.ge.s32.totalorder %s649, %s642
                %s654 = sphi 0, %s661
                %s655 = sphi %s645, %s664
                %s656 = sphi %s647, %s665
              $region74: #{tpu_custom_call.1} parent=63 // loop_header_branch
                %653 = sbr.rel (%p650) target = $region78
              $region75: #{tpu_custom_call.1} parent=63 // loop_body
                %v657 = vld [vmem:[%s655] sm:$0xff]
                %658 = vst [vmem:[%s656] sm:$0xff] %v657
                %s659 = sadd.s32 1, %s654
                %p660 = scmp.ge.s32.totalorder %s659, %s642
                %s661 = scalar_select %p660, 0, %s659
                %s662 = smul.u32 %s661, 8
                %s663 = smul.u32 %s661, 8
                %s664 = scalar_lea.vmem %s645, %s662 [#allocation2]
                %s665 = scalar_lea.vmem %s647, %s663
              $region76: #{tpu_custom_call.1} parent=63 // loop_footer
                %s651 = sadd.s32 %s649, 1
              $region77: #{tpu_custom_call.1} parent=63 // loop_footer_branch
                %648 = sbr.rel target = $region73
              $region78: #{tpu_custom_call.1} parent=63 // loop_exit
                _
            $region64: #{tpu_custom_call.1} parent=55 // pred_fallthru
              _
          $region56: #{tpu_custom_call.1} parent=51 // pred_fallthru
            _
          %716 = vnop
        $region52: #{tpu_custom_call.1} parent=47 // pred_fallthru
          _
      $region48: #{tpu_custom_call.1} parent=5 // pred_fallthru
        _
      %p717 = scmp.le.s32.totalorder 2, %s13
      // Predicated region
      $region101: #{tpu_custom_call.1} parent=5 // pred_check
        %p718 = pneg %p717
      $region102: #{tpu_custom_call.1} parent=5 // pred_check_branch
        %720 = sbr.rel (%p718) target = $region104
      $region103: #{tpu_custom_call.1} parent=5 // pred_region
        %s721 = ssub.s32 %s13, 2
        // Predicated region
        $region105: #{tpu_custom_call.1} parent=103 // pred_check
          %p722 = pneg %p194
        $region106: #{tpu_custom_call.1} parent=103 // pred_check_branch
          %724 = sbr.rel (%p722) target = $region108
        $region107: #{tpu_custom_call.1} parent=103 // pred_region
          %s725 = sand.u32 %s179, 1
          %s726 = sand.u32 %s179, 1
          %s727 = smul.addr %s726, 16
          %s728 = scalar_lea.vmem [#allocation2], %s727
        $region108: #{tpu_custom_call.1} parent=103 // pred_fallthru
          _
      $region104: #{tpu_custom_call.1} parent=5 // pred_fallthru
        _
    $region6: #{tpu_custom_call.1} parent=1 // loop_footer
      %s17 = sadd.s32 1, %s13
    $region7: #{tpu_custom_call.1} parent=1 // loop_footer_branch
      %12 = sbr.rel target = $region3
    $region8: #{tpu_custom_call.1} parent=1 // loop_exit
      _

</llo_original>
